<compile_context>
chip_gen: v5e
topology: v5e:2x2
jax: 0.10.0
libtpu: 0.0.40
codegen_flags: <defaults>
</compile_context>

<pallas_src>
import functools

import jax
import jax.numpy as jnp
from jax.experimental import pallas as pl
from jax.experimental.pallas import tpu as pltpu


# --------------------------------------------------------------------------- #
# Kernels
# --------------------------------------------------------------------------- #
def _affine_store(norm_f32, g_ref, b_ref, o_ref):
    """gamma * norm + beta, straight from the (1, F) vregs (#8), then store."""
    if o_ref.dtype == jnp.bfloat16:
        # bf16 affine epilogue (#5): halves VALU element width for this stage.
        out = (norm_f32.astype(jnp.bfloat16) * g_ref[...].astype(jnp.bfloat16)
               + b_ref[...].astype(jnp.bfloat16))
    else:
        out = (norm_f32 * g_ref[...].astype(jnp.float32)
               + b_ref[...].astype(jnp.float32))
    o_ref[...] = out.astype(o_ref.dtype)


def _layernorm_kernel(x_ref, g_ref, b_ref, o_ref, *, eps: float, n_feat: int):
    """Plain path: one logical row per block row (features >= 128)."""
    x = x_ref[...]
    if x.dtype != jnp.float32:                       # skip the no-op cast for f32 (#5)
        x = x.astype(jnp.float32)
    mean = jnp.mean(x, axis=-1, keepdims=True)       # (TR, 1)
    d = x - mean
    # torch.std default is unbiased: divide by (N - 1).  (N == 1 -> NaN, like torch.)
    var = jnp.sum(d * d, axis=-1, keepdims=True) / jnp.float32(n_feat - 1)
    # Narrow exact reciprocal on the (TR, 1) column, then broadcast-multiply:
    # avoids a full (TR, F) divide on the VPU.
    inv = 1.0 / (jnp.sqrt(var) + jnp.float32(eps))
    _affine_store(d * inv, g_ref, b_ref, o_ref)


def _layernorm_packed_kernel(x_ref, g_ref, b_ref, o_ref, *, eps: float,
                             n_feat: int, n_pack: int):
    """Lane-packed path (#7): each block row holds n_pack independent logical
    rows of n_feat features, concatenated along lanes (lane-dense I/O)."""
    F = n_feat
    x = x_ref[...]
    if x.dtype != jnp.float32:
        x = x.astype(jnp.float32)
    parts = []
    for g in range(n_pack):                          # static unroll, n_pack <= 16
        seg = x[:, g * F:(g + 1) * F]                # (TR, F) static lane slice
        mean = jnp.mean(seg, axis=-1, keepdims=True)
        d = seg - mean
        var = jnp.sum(d * d, axis=-1, keepdims=True) / jnp.float32(F - 1)
        inv = 1.0 / (jnp.sqrt(var) + jnp.float32(eps))
        parts.append(d * inv)
    norm = jnp.concatenate(parts, axis=-1)           # (TR, n_pack * F), lane-dense
    _affine_store(norm, g_ref, b_ref, o_ref)


# --------------------------------------------------------------------------- #
# Wrapper helpers
# --------------------------------------------------------------------------- #
def _vmem_cap_bytes() -> int:
    """Generation-aware ceiling for vmem_limit_bytes (#3)."""
    phys = None
    try:
        phys = getattr(pltpu.get_tpu_info(), "vmem_capacity_bytes", None)
    except Exception:
        phys = None
    if phys is not None and phys <= (64 << 20):      # v7x: 64 MiB per TensorCore
        return 40 << 20
    return 48 << 20                                  # v5e / v6e: 128 MiB physical


def _grid_semantics():
    """CORE_PARALLEL on v7x so the row grid really splits across both TCs (#4)."""
    core_parallel = getattr(pltpu, "CORE_PARALLEL", None)
    kind = ""
    try:
        kind = jax.devices()[0].device_kind.lower()
    except Exception:
        pass
    if core_parallel is not None and ("v7" in kind or "tpu7" in kind):
        return (core_parallel,)
    return ("parallel",)


def _pick_row_tile(lane_width: int, dtype_bytes: int) -> int:
    """Row tile giving ~2 MiB blocks (#1/#9); roofline already saturates ~1 MiB."""
    target_block_bytes = 2 * 1024 * 1024
    t = target_block_bytes // max(1, lane_width * dtype_bytes)
    t = max(8, min(int(t), 4096))
    align = 16 if dtype_bytes == 2 else 8            # bf16 sublane packing is 16x128
    return max(align, (t // align) * align)


def _default_vmem_limit(block_rows: int, lane_width: int,
                        in_bytes: int, out_bytes: int) -> int:
    """Double-buffered in/out blocks + in-kernel f32 temporaries (#2)."""
    io = 2 * block_rows * lane_width * (in_bytes + out_bytes)   # 2 bufs each
    temps = 4 * block_rows * lane_width * 4                     # x, d, norm, out (f32)
    est = io + temps + (8 << 20)                                # + compiler scratch
    return int(min(max(est, 32 << 20), _vmem_cap_bytes()))


def _maybe_buffered_spec(shape, index_map, buffers: int):
    """BlockSpec with pipeline_mode=pl.Buffered(n) when requested (#6)."""
    if buffers > 2:
        try:
            return pl.BlockSpec(shape, index_map, pipeline_mode=pl.Buffered(buffers))
        except (TypeError, AttributeError):
            pass                                     # older JAX: default 2-deep
    return pl.BlockSpec(shape, index_map)


# --------------------------------------------------------------------------- #
# Public entry point
# --------------------------------------------------------------------------- #
def layer_norm(x, gamma, beta, eps=1e-6, row_tile=None, vmem_limit_bytes=None,
               pack_small_features=True):
    """x: (..., features); gamma, beta: (features,)."""
    orig_shape = x.shape
    features = int(orig_shape[-1])
    out_dtype = jnp.result_type(x.dtype, gamma.dtype, beta.dtype)

    x2 = x.reshape(-1, features)                     # (rows, features)
    rows = x2.shape[0]

    # ---- lane packing for small feature dims (#7) -------------------------
    # features < 128 would leave >= 75% of the 128 lanes idle and force masked
    # partial stores; pack G rows into one lane-row of width G*features.
    pack = 1
    if pack_small_features and features < 128:
        pack = max(1, min(128 // features, 16))      # cap static unroll at 16
        while pack > 1 and rows % pack != 0:
            pack //= 2                               # need rows divisible by G
    lane_width = features * pack
    rows_k = rows // pack
    if pack > 1:
        x2 = x2.reshape(rows_k, lane_width)
        g2 = jnp.tile(gamma.reshape(1, features), (1, pack))
        b2 = jnp.tile(beta.reshape(1, features), (1, pack))
    else:
        g2 = gamma.reshape(1, features)
        b2 = beta.reshape(1, features)
    # TODO(synk): features < 8 (pack capped at 16) still under-fills lanes.

    in_bytes = jnp.dtype(x.dtype).itemsize
    out_bytes = jnp.dtype(out_dtype).itemsize

    if row_tile is None:
        row_tile = _pick_row_tile(lane_width, max(in_bytes, out_bytes))

    if rows_k <= row_tile:
        block_rows = rows_k                          # full-extent block, 1 step
        steps = 1
    else:
        block_rows = int(row_tile)
        # Ragged last block: Pallas masks OOB output writes; rows are
        # independent, so the overhanging (undefined) input rows are harmless.
        steps = int(pl.cdiv(rows_k, block_rows))
    grid = (steps,)

    if vmem_limit_bytes is None:
        vmem_limit_bytes = _default_vmem_limit(block_rows, lane_width,
                                               in_bytes, out_bytes)

    if pack > 1:
        kernel = functools.partial(_layernorm_packed_kernel, eps=float(eps),
                                   n_feat=features, n_pack=pack)
    else:
        kernel = functools.partial(_layernorm_kernel, eps=float(eps),
                                   n_feat=features)

    x_spec = _maybe_buffered_spec((block_rows, lane_width), lambda i: (i, 0),
                                  buffers=3 if steps >= 3 else 2)

    out = pl.pallas_call(
        kernel,
        out_shape=jax.ShapeDtypeStruct((rows_k, lane_width), out_dtype),
        grid_spec=pltpu.PrefetchScalarGridSpec(
            num_scalar_prefetch=0,
            grid=grid,
            in_specs=[
                x_spec,
                pl.BlockSpec((1, lane_width), lambda i: (0, 0)),
                pl.BlockSpec((1, lane_width), lambda i: (0, 0)),
            ],
            out_specs=pl.BlockSpec((block_rows, lane_width), lambda i: (i, 0)),
        ),
        compiler_params=pltpu.CompilerParams(
            dimension_semantics=_grid_semantics(),
            vmem_limit_bytes=int(vmem_limit_bytes),
        ),
    )(x2, g2, b2)

    return out.reshape(orig_shape)


# --------------------------------------------------------------------------- #
# Reference + smoke test
# --------------------------------------------------------------------------- #
def _reference(x, gamma, beta, eps=1e-6):
    x32 = x.astype(jnp.float32)
    mean = jnp.mean(x32, axis=-1, keepdims=True)
    std = jnp.std(x32, axis=-1, keepdims=True, ddof=1)   # unbiased, like torch.std
    out = (gamma.astype(jnp.float32) * (x32 - mean) / (std + eps)
           + beta.astype(jnp.float32))
    return out.astype(jnp.result_type(x.dtype, gamma.dtype, beta.dtype))


if __name__ == "__main__":
    key = jax.random.PRNGKey(0)

    # Case 1: module-typical small shapes (batch, seq, hidden) with hidden < 128
    #         -> exercises the lane-packing path (#7).
    batch, seq, hidden = 2, 8, 32
    x = jax.random.normal(key, (batch, seq, hidden), dtype=jnp.float32)
    gamma = jnp.ones((hidden,), dtype=jnp.float32)   # nn.Parameter(torch.ones(F))
    beta = jnp.zeros((hidden,), dtype=jnp.float32)   # nn.Parameter(torch.zeros(F))
    out = jax.block_until_ready(layer_norm(x, gamma, beta, eps=1e-6))
    ref = _reference(x, gamma, beta, eps=1e-6)
    assert out.shape == x.shape
    assert jnp.allclose(out, ref, atol=1e-5, rtol=1e-5), "mismatch (case 1, packed)"

    # Case 2: F = 128, ragged multi-step grid (exercises Buffered(3) pipeline).
    x2 = jax.random.normal(jax.random.PRNGKey(1), (2, 50, 128), dtype=jnp.float32)
    g2 = jax.random.normal(jax.random.PRNGKey(2), (128,), dtype=jnp.float32)
    b2 = jax.random.normal(jax.random.PRNGKey(3), (128,), dtype=jnp.float32)
    out2 = jax.block_until_ready(layer_norm(x2, g2, b2, eps=1e-6, row_tile=32))
    ref2 = _reference(x2, g2, b2, eps=1e-6)
    assert jnp.allclose(out2, ref2, atol=1e-5, rtol=1e-5), "mismatch (case 2, ragged)"

    # Case 3: bf16 I/O -> exercises the bf16 affine epilogue (#5).
    xb = jax.random.normal(jax.random.PRNGKey(4), (4, 8, 256),
                           dtype=jnp.float32).astype(jnp.bfloat16)
    gb = jax.random.normal(jax.random.PRNGKey(5), (256,),
                           dtype=jnp.float32).astype(jnp.bfloat16)
    bb = jax.random.normal(jax.random.PRNGKey(6), (256,),
                           dtype=jnp.float32).astype(jnp.bfloat16)
    out3 = jax.block_until_ready(layer_norm(xb, gb, bb, eps=1e-6))
    ref3 = _reference(xb, gb, bb, eps=1e-6)
    assert out3.dtype == jnp.bfloat16
    assert jnp.allclose(out3.astype(jnp.float32), ref3.astype(jnp.float32),
                        atol=1.5e-1, rtol=5e-2), "mismatch (case 3, bf16)"

    print("KERNEL_OK")
</pallas_src>

<mosaic_0001>
module attributes {stable_mosaic.version = 11 : i64} {
  func.func @_layernorm_packed_kernel(%arg0: i32, %arg1: memref<4x128xf32, #tpu.memory_space<vmem>>, %arg2: memref<1x128xf32, #tpu.memory_space<vmem>>, %arg3: memref<1x128xf32, #tpu.memory_space<vmem>>, %arg4: memref<4x128xf32, #tpu.memory_space<vmem>>) attributes {dimension_semantics = [#tpu.dimension_semantics<parallel>], iteration_bounds = array<i64: 1>, scalar_prefetch = 0 : i64, scratch_operands = 0 : i64, tpu.core_type = #tpu.core_type<tc>, window_params = [{transform_indices = @transform_0, window_bounds = array<i64: 4, 128>}, {pipeline_mode = #tpu.pipeline_mode<synchronous>, transform_indices = @transform_1, window_bounds = array<i64: 1, 128>}, {pipeline_mode = #tpu.pipeline_mode<synchronous>, transform_indices = @transform_2, window_bounds = array<i64: 1, 128>}, {transform_indices = @transform_3, window_bounds = array<i64: 4, 128>}]} {
    %c0 = arith.constant 0 : index
    %c0_0 = arith.constant 0 : index
    %0 = vector.load %arg1[%c0, %c0_0] : memref<4x128xf32, #tpu.memory_space<vmem>>, vector<4x128xf32>
    %1 = vector.extract_strided_slice %0 {offsets = [0, 0], sizes = [4, 32], strides = [1, 1]} : vector<4x128xf32> to vector<4x32xf32>
    %cst = arith.constant dense<0.000000e+00> : vector<4xf32>
    %2 = vector.multi_reduction <add>, %1, %cst [1] : vector<4x32xf32> to vector<4xf32>
    %3 = vector.shape_cast %2 : vector<4xf32> to vector<4x1xf32>
    %cst_1 = arith.constant 3.200000e+01 : f32
    %4 = vector.broadcast %cst_1 : f32 to vector<4x1xf32>
    %5 = arith.divf %3, %4 : vector<4x1xf32>
    %6 = vector.broadcast %5 : vector<4x1xf32> to vector<4x32xf32>
    %7 = arith.subf %1, %6 : vector<4x32xf32>
    %8 = arith.mulf %7, %7 : vector<4x32xf32>
    %cst_2 = arith.constant dense<0.000000e+00> : vector<4xf32>
    %9 = vector.multi_reduction <add>, %8, %cst_2 [1] : vector<4x32xf32> to vector<4xf32>
    %10 = vector.shape_cast %9 : vector<4xf32> to vector<4x1xf32>
    %cst_3 = arith.constant 3.100000e+01 : f32
    %11 = vector.broadcast %cst_3 : f32 to vector<4x1xf32>
    %12 = arith.divf %10, %11 : vector<4x1xf32>
    %13 = math.sqrt %12 : vector<4x1xf32>
    %cst_4 = arith.constant 9.99999997E-7 : f32
    %14 = vector.broadcast %cst_4 : f32 to vector<4x1xf32>
    %15 = arith.addf %13, %14 : vector<4x1xf32>
    %cst_5 = arith.constant 1.000000e+00 : f32
    %16 = vector.broadcast %cst_5 : f32 to vector<4x1xf32>
    %17 = arith.divf %16, %15 : vector<4x1xf32>
    %18 = vector.broadcast %17 : vector<4x1xf32> to vector<4x32xf32>
    %19 = arith.mulf %7, %18 : vector<4x32xf32>
    %20 = vector.extract_strided_slice %0 {offsets = [0, 32], sizes = [4, 32], strides = [1, 1]} : vector<4x128xf32> to vector<4x32xf32>
    %cst_6 = arith.constant dense<0.000000e+00> : vector<4xf32>
    %21 = vector.multi_reduction <add>, %20, %cst_6 [1] : vector<4x32xf32> to vector<4xf32>
    %22 = vector.shape_cast %21 : vector<4xf32> to vector<4x1xf32>
    %cst_7 = arith.constant 3.200000e+01 : f32
    %23 = vector.broadcast %cst_7 : f32 to vector<4x1xf32>
    %24 = arith.divf %22, %23 : vector<4x1xf32>
    %25 = vector.broadcast %24 : vector<4x1xf32> to vector<4x32xf32>
    %26 = arith.subf %20, %25 : vector<4x32xf32>
    %27 = arith.mulf %26, %26 : vector<4x32xf32>
    %cst_8 = arith.constant dense<0.000000e+00> : vector<4xf32>
    %28 = vector.multi_reduction <add>, %27, %cst_8 [1] : vector<4x32xf32> to vector<4xf32>
    %29 = vector.shape_cast %28 : vector<4xf32> to vector<4x1xf32>
    %cst_9 = arith.constant 3.100000e+01 : f32
    %30 = vector.broadcast %cst_9 : f32 to vector<4x1xf32>
    %31 = arith.divf %29, %30 : vector<4x1xf32>
    %32 = math.sqrt %31 : vector<4x1xf32>
    %cst_10 = arith.constant 9.99999997E-7 : f32
    %33 = vector.broadcast %cst_10 : f32 to vector<4x1xf32>
    %34 = arith.addf %32, %33 : vector<4x1xf32>
    %cst_11 = arith.constant 1.000000e+00 : f32
    %35 = vector.broadcast %cst_11 : f32 to vector<4x1xf32>
    %36 = arith.divf %35, %34 : vector<4x1xf32>
    %37 = vector.broadcast %36 : vector<4x1xf32> to vector<4x32xf32>
    %38 = arith.mulf %26, %37 : vector<4x32xf32>
    %39 = vector.extract_strided_slice %0 {offsets = [0, 64], sizes = [4, 32], strides = [1, 1]} : vector<4x128xf32> to vector<4x32xf32>
    %cst_12 = arith.constant dense<0.000000e+00> : vector<4xf32>
    %40 = vector.multi_reduction <add>, %39, %cst_12 [1] : vector<4x32xf32> to vector<4xf32>
    %41 = vector.shape_cast %40 : vector<4xf32> to vector<4x1xf32>
    %cst_13 = arith.constant 3.200000e+01 : f32
    %42 = vector.broadcast %cst_13 : f32 to vector<4x1xf32>
    %43 = arith.divf %41, %42 : vector<4x1xf32>
    %44 = vector.broadcast %43 : vector<4x1xf32> to vector<4x32xf32>
    %45 = arith.subf %39, %44 : vector<4x32xf32>
    %46 = arith.mulf %45, %45 : vector<4x32xf32>
    %cst_14 = arith.constant dense<0.000000e+00> : vector<4xf32>
    %47 = vector.multi_reduction <add>, %46, %cst_14 [1] : vector<4x32xf32> to vector<4xf32>
    %48 = vector.shape_cast %47 : vector<4xf32> to vector<4x1xf32>
    %cst_15 = arith.constant 3.100000e+01 : f32
    %49 = vector.broadcast %cst_15 : f32 to vector<4x1xf32>
    %50 = arith.divf %48, %49 : vector<4x1xf32>
    %51 = math.sqrt %50 : vector<4x1xf32>
    %cst_16 = arith.constant 9.99999997E-7 : f32
    %52 = vector.broadcast %cst_16 : f32 to vector<4x1xf32>
    %53 = arith.addf %51, %52 : vector<4x1xf32>
    %cst_17 = arith.constant 1.000000e+00 : f32
    %54 = vector.broadcast %cst_17 : f32 to vector<4x1xf32>
    %55 = arith.divf %54, %53 : vector<4x1xf32>
    %56 = vector.broadcast %55 : vector<4x1xf32> to vector<4x32xf32>
    %57 = arith.mulf %45, %56 : vector<4x32xf32>
    %58 = vector.extract_strided_slice %0 {offsets = [0, 96], sizes = [4, 32], strides = [1, 1]} : vector<4x128xf32> to vector<4x32xf32>
    %cst_18 = arith.constant dense<0.000000e+00> : vector<4xf32>
    %59 = vector.multi_reduction <add>, %58, %cst_18 [1] : vector<4x32xf32> to vector<4xf32>
    %60 = vector.shape_cast %59 : vector<4xf32> to vector<4x1xf32>
    %cst_19 = arith.constant 3.200000e+01 : f32
    %61 = vector.broadcast %cst_19 : f32 to vector<4x1xf32>
    %62 = arith.divf %60, %61 : vector<4x1xf32>
    %63 = vector.broadcast %62 : vector<4x1xf32> to vector<4x32xf32>
    %64 = arith.subf %58, %63 : vector<4x32xf32>
    %65 = arith.mulf %64, %64 : vector<4x32xf32>
    %cst_20 = arith.constant dense<0.000000e+00> : vector<4xf32>
    %66 = vector.multi_reduction <add>, %65, %cst_20 [1] : vector<4x32xf32> to vector<4xf32>
    %67 = vector.shape_cast %66 : vector<4xf32> to vector<4x1xf32>
    %cst_21 = arith.constant 3.100000e+01 : f32
    %68 = vector.broadcast %cst_21 : f32 to vector<4x1xf32>
    %69 = arith.divf %67, %68 : vector<4x1xf32>
    %70 = math.sqrt %69 : vector<4x1xf32>
    %cst_22 = arith.constant 9.99999997E-7 : f32
    %71 = vector.broadcast %cst_22 : f32 to vector<4x1xf32>
    %72 = arith.addf %70, %71 : vector<4x1xf32>
    %cst_23 = arith.constant 1.000000e+00 : f32
    %73 = vector.broadcast %cst_23 : f32 to vector<4x1xf32>
    %74 = arith.divf %73, %72 : vector<4x1xf32>
    %75 = vector.broadcast %74 : vector<4x1xf32> to vector<4x32xf32>
    %76 = arith.mulf %64, %75 : vector<4x32xf32>
    %77 = tpu.concatenate %19, %38, %57, %76 in 1 : vector<4x32xf32>, vector<4x32xf32>, vector<4x32xf32>, vector<4x32xf32> -> vector<4x128xf32>
    %c0_24 = arith.constant 0 : index
    %c0_25 = arith.constant 0 : index
    %78 = vector.load %arg2[%c0_24, %c0_25] : memref<1x128xf32, #tpu.memory_space<vmem>>, vector<1x128xf32>
    %79 = vector.broadcast %78 : vector<1x128xf32> to vector<4x128xf32>
    %80 = arith.mulf %77, %79 : vector<4x128xf32>
    %c0_26 = arith.constant 0 : index
    %c0_27 = arith.constant 0 : index
    %81 = vector.load %arg3[%c0_26, %c0_27] : memref<1x128xf32, #tpu.memory_space<vmem>>, vector<1x128xf32>
    %82 = vector.broadcast %81 : vector<1x128xf32> to vector<4x128xf32>
    %83 = arith.addf %80, %82 : vector<4x128xf32>
    %c0_28 = arith.constant 0 : index
    %c0_29 = arith.constant 0 : index
    %84 = vector.load %arg4[%c0_28, %c0_29] : memref<4x128xf32, #tpu.memory_space<vmem>>, vector<4x128xf32>
    tpu.vector_store %arg4[%c0_28, %c0_29], %83 {strides = array<i32>} : memref<4x128xf32, #tpu.memory_space<vmem>>, vector<4x128xf32>,
    return
  }
  func.func @transform_0(%arg0: i32) -> (i32, i32) {
    %c0_i32 = arith.constant 0 : i32
    %c0_i32_0 = arith.constant 0 : i32
    return %arg0, %c0_i32 : i32, i32
  }
  func.func @transform_1(%arg0: i32) -> (i32, i32) {
    %c0_i32 = arith.constant 0 : i32
    %c0_i32_0 = arith.constant 0 : i32
    %c0_i32_1 = arith.constant 0 : i32
    return %c0_i32, %c0_i32_0 : i32, i32
  }
  func.func @transform_2(%arg0: i32) -> (i32, i32) {
    %c0_i32 = arith.constant 0 : i32
    %c0_i32_0 = arith.constant 0 : i32
    %c0_i32_1 = arith.constant 0 : i32
    return %c0_i32, %c0_i32_0 : i32, i32
  }
  func.func @transform_3(%arg0: i32) -> (i32, i32) {
    %c0_i32 = arith.constant 0 : i32
    %c0_i32_0 = arith.constant 0 : i32
    return %arg0, %c0_i32 : i32, i32
  }
}

</mosaic_0001>

<llo_original>
// kernel: tpu_custom_call.1
$region0: #{tpu_custom_call.1}
  #allocation0 [shape = 'u32[]', space=smem, size = 0x4, offset = 0x4, fixed_abs, tag = 'smem constant byte address 0x4 - core index']
  #allocation1 [shape = 'u32[72,128]{1,0:T(1,128)}', space=vmem, size = 0x9000, scoped, tag = 'internal scratch']
  %s0 = inlined_call_operand.hbm [shape: f32[4,128], index: 0, kind: input, shape index: {}]
  %s1 = inlined_call_operand.hbm [shape: f32[1,128], index: 1, kind: input, shape index: {}]
  %s2 = inlined_call_operand.vmem [shape: f32[1,128], index: 2, kind: input, shape index: {}]
  %s3 = inlined_call_operand.hbm [shape: f32[4,128], index: 3, kind: output, shape index: {}]
  %s4 = sld [smem:[#allocation0]]
  $region30: #{tpu_custom_call.1} parent=0
    _
  %s6 = ssub.s32 1, %s4
  %s7 = scalar_select 0, %s6, %s4
  $region1: #{tpu_custom_call.1} parent=0
    #allocation2 [shape = 'u8[2048]{0}', space=vmem, size = 0x800, scoped, tag = 'input window, operand 0, single buffered']
    #allocation3 [shape = 's32[1]{0}', space=sflag, size = 0x4, scoped, tag = 'scoped memory for tpu_custom_call.1']
    #allocation4 [shape = 's32[1]{0}', space=sflag, size = 0x4, scoped, tag = 'scoped memory for tpu_custom_call.1']
    #allocation5 [shape = 'u8[512]{0}', space=vmem, size = 0x400, scoped, tag = 'input window, operand 1, single buffered']
    #allocation6 [shape = 's32[1]{0}', space=sflag, size = 0x4, scoped, tag = 'scoped memory for tpu_custom_call.1']
    #allocation7 [shape = 'u8[2048]{0}', space=vmem, size = 0x800, scoped, tag = 'output window, operand 0, single buffered']
    %8 = vsyncpa [#allocation3], 0
    %9 = vsyncpa [#allocation6], 0
    %10 = vsyncpa [#allocation4], 0
    // Predicated region
    $region2: #{tpu_custom_call.1} parent=1 // pred_check
      _
    $region3: #{tpu_custom_call.1} parent=1 // pred_check_branch
      %12 = sbr.rel (0) target = $region5
    $region4: #{tpu_custom_call.1} parent=1 // pred_region
      %14 = vsyncadd [#allocation3], 0
      %s16 = sshll.u32 %s0, 4
      %s17 = int_to_ptr.hbm [resolvable:$true] %s16
      %s18 = sshll.u32 [#allocation2], 4
      %s19 = int_to_ptr.vmem [resolvable:$true] %s18
      %21 = dma.hbm_to_vmem [thread:$0]  %s17, 64, %s19, [#allocation3]
    $region5: #{tpu_custom_call.1} parent=1 // pred_fallthru
      _
    // Predicated region
    $region6: #{tpu_custom_call.1} parent=1 // pred_check
      _
    $region7: #{tpu_custom_call.1} parent=1 // pred_check_branch
      %23 = sbr.rel (0) target = $region9
    $region8: #{tpu_custom_call.1} parent=1 // pred_region
      %25 = vsyncadd [#allocation6], 0
      %s27 = sshll.u32 %s1, 4
      %s28 = int_to_ptr.hbm [resolvable:$true] %s27
      %s29 = sshll.u32 [#allocation5], 4
      %s30 = int_to_ptr.vmem [resolvable:$true] %s29
      %32 = dma.hbm_to_vmem [thread:$0]  %s28, 16, %s30, [#allocation6]
    $region9: #{tpu_custom_call.1} parent=1 // pred_fallthru
      _
    // Predicated region
    $region10: #{tpu_custom_call.1} parent=1 // pred_check
      _
    $region11: #{tpu_custom_call.1} parent=1 // pred_check_branch
      %34 = sbr.rel (0) target = $region13
    $region12: #{tpu_custom_call.1} parent=1 // pred_region
      _
    $region13: #{tpu_custom_call.1} parent=1 // pred_fallthru
      _
    // Predicated region
    $region14: #{tpu_custom_call.1} parent=1 // pred_check
      _
    $region15: #{tpu_custom_call.1} parent=1 // pred_check_branch
      %36 = sbr.rel (0) target = $region17
    $region16: #{tpu_custom_call.1} parent=1 // pred_region
      %38 = dma.done [#allocation3], 64
    $region17: #{tpu_custom_call.1} parent=1 // pred_fallthru
      _
    // Predicated region
    $region18: #{tpu_custom_call.1} parent=1 // pred_check
      _
    $region19: #{tpu_custom_call.1} parent=1 // pred_check_branch
      %40 = sbr.rel (0) target = $region21
    $region20: #{tpu_custom_call.1} parent=1 // pred_region
      %42 = dma.done [#allocation6], 16
    $region21: #{tpu_custom_call.1} parent=1 // pred_fallthru
      _
    %v43 = vld [vmem:[#allocation2] sm:$0xf]
    %vm44 = vcmask 257024
    %v45 = vsel %vm44, %v43, 0.0
    %46 = vadd.xlane.f32.xlu0 %v45
    %v47 = vpop.xlane.xlu0 %46
    %v48 = vrcp.pop 32.0
    %v49 = vmul.f32 32.0, %v48
    %v50 = vsub.f32 1.0, %v49
    %v51 = vmul.f32 %v48, %v50
    %v52 = vadd.f32 %v48, %v51
    %vm53 = vweird.f32 %v48
    %v54 = vsel %vm53, %v48, %v52
    %v55 = vmul.f32 %v47, %v54
    %v56 = vsub.f32 %v43, %v55
    %v57 = vmul.f32 %v56, %v56
    %v58 = vsel %vm44, %v57, 0.0
    %59 = vadd.xlane.f32.xlu0 %v58
    %v60 = vpop.xlane.xlu0 %59
    %v61 = vrcp.pop 31.0
    %v62 = vmul.f32 31.0, %v61
    %v63 = vsub.f32 1.0, %v62
    %v64 = vmul.f32 %v61, %v63
    %v65 = vadd.f32 %v61, %v64
    %vm66 = vweird.f32 %v61
    %v67 = vsel %vm66, %v61, %v65
    %v68 = vmul.f32 %v60, %v67
    %v69 = vrsqrt.pop %v68
    %v70 = vmul.f32 %v69, %v68
    %v71 = vmul.f32 %v70, %v69
    %v72 = vmul.f32 0.5, %v71
    %v73 = vsub.f32 1.5, %v72
    %v74 = vmul.f32 %v69, %v73
    %v75 = vmul.f32 %v68, %v74
    %vm76 = vcmp.eq.f32.partialorder %v68, inf
    %v77 = vsel %vm76, %v68, %v75
    %vm78 = vcmp.eq.f32.partialorder %v68, 0.0
    %v79 = vand.u32 %v68, 2147483648
    %v80 = vsel %vm78, %v79, %v77
    %v81 = vadd.f32 %v80, 1e-06
    %v82 = vrcp.pop %v81
    %v83 = vmul.f32 %v81, %v82
    %v84 = vsub.f32 1.0, %v83
    %v85 = vmul.f32 %v82, %v84
    %v86 = vadd.f32 %v82, %v85
    %vm87 = vweird.f32 %v81
    %vm88 = vweird.f32 %v82
    %vm89 = vmor %vm87, %vm88
    %v90 = vsel %vm89, %v82, %v86
    %v91 = vand.u32 2147483647, %v81
    %vm92 = vcmp.eq.f32.partialorder %v91, 8.507059e+37
    %v93 = vand.u32 %v81, 2147483648
    %v94 = vor.u32 1.1754944e-38, %v93
    %v95 = vsel %vm92, %v94, %v90
    %v96 = vmul.f32 1.0, %v95
    %v97 = vmul.f32 %v56, %v96
    %99 = vrot.lane.b32.xlu0 %v43, 96
    %v100 = vpop.permute.xlu0 %99
    %v102 = vsel %vm44, %v100, 0.0
    %103 = vadd.xlane.f32.xlu0 %v102
    %v104 = vpop.xlane.xlu0 %103
    %v105 = vmul.f32 %v104, %v54
    %v106 = vsub.f32 %v43, %v105
    %v107 = vmul.f32 %v106, %v106
    %109 = vrot.lane.b32.xlu0 %v107, 96
    %v110 = vpop.permute.xlu0 %109
    %v112 = vsel %vm44, %v110, 0.0
    %113 = vadd.xlane.f32.xlu0 %v112
    %v114 = vpop.xlane.xlu0 %113
    %v115 = vmul.f32 %v114, %v67
    %v116 = vrsqrt.pop %v115
    %v117 = vmul.f32 %v116, %v115
    %v118 = vmul.f32 %v117, %v116
    %v119 = vmul.f32 0.5, %v118
    %v120 = vsub.f32 1.5, %v119
    %v121 = vmul.f32 %v116, %v120
    %v122 = vmul.f32 %v115, %v121
    %vm123 = vcmp.eq.f32.partialorder %v115, inf
    %v124 = vsel %vm123, %v115, %v122
    %vm125 = vcmp.eq.f32.partialorder %v115, 0.0
    %v126 = vand.u32 %v115, 2147483648
    %v127 = vsel %vm125, %v126, %v124
    %v128 = vadd.f32 %v127, 1e-06
    %v129 = vrcp.pop %v128
    %v130 = vmul.f32 %v128, %v129
    %v131 = vsub.f32 1.0, %v130
    %v132 = vmul.f32 %v129, %v131
    %v133 = vadd.f32 %v129, %v132
    %vm134 = vweird.f32 %v128
    %vm135 = vweird.f32 %v129
    %vm136 = vmor %vm134, %vm135
    %v137 = vsel %vm136, %v129, %v133
    %v138 = vand.u32 2147483647, %v128
    %vm139 = vcmp.eq.f32.partialorder %v138, 8.507059e+37
    %v140 = vand.u32 %v128, 2147483648
    %v141 = vor.u32 1.1754944e-38, %v140
    %v142 = vsel %vm139, %v141, %v137
    %v143 = vmul.f32 1.0, %v142
    %v144 = vmul.f32 %v106, %v143
    %145 = vrot.lane.b32.xlu0 %v43, 64
    %v146 = vpop.permute.xlu0 %145
    %v148 = vsel %vm44, %v146, 0.0
    %149 = vadd.xlane.f32.xlu0 %v148
    %v150 = vpop.xlane.xlu0 %149
    %v151 = vmul.f32 %v150, %v54
    %v152 = vsub.f32 %v43, %v151
    %v153 = vmul.f32 %v152, %v152
    %155 = vrot.lane.b32.xlu0 %v153, 64
    %v156 = vpop.permute.xlu0 %155
    %v158 = vsel %vm44, %v156, 0.0
    %159 = vadd.xlane.f32.xlu0 %v158
    %v160 = vpop.xlane.xlu0 %159
    %v161 = vmul.f32 %v160, %v67
    %v162 = vrsqrt.pop %v161
    %v163 = vmul.f32 %v162, %v161
    %v164 = vmul.f32 %v163, %v162
    %v165 = vmul.f32 0.5, %v164
    %v166 = vsub.f32 1.5, %v165
    %v167 = vmul.f32 %v162, %v166
    %v168 = vmul.f32 %v161, %v167
    %vm169 = vcmp.eq.f32.partialorder %v161, inf
    %v170 = vsel %vm169, %v161, %v168
    %vm171 = vcmp.eq.f32.partialorder %v161, 0.0
    %v172 = vand.u32 %v161, 2147483648
    %v173 = vsel %vm171, %v172, %v170
    %v174 = vadd.f32 %v173, 1e-06
    %v175 = vrcp.pop %v174
    %v176 = vmul.f32 %v174, %v175
    %v177 = vsub.f32 1.0, %v176
    %v178 = vmul.f32 %v175, %v177
    %v179 = vadd.f32 %v175, %v178
    %vm180 = vweird.f32 %v174
    %vm181 = vweird.f32 %v175
    %vm182 = vmor %vm180, %vm181
    %v183 = vsel %vm182, %v175, %v179
    %v184 = vand.u32 2147483647, %v174
    %vm185 = vcmp.eq.f32.partialorder %v184, 8.507059e+37
    %v186 = vand.u32 %v174, 2147483648
    %v187 = vor.u32 1.1754944e-38, %v186
    %v188 = vsel %vm185, %v187, %v183
    %v189 = vmul.f32 1.0, %v188
    %v190 = vmul.f32 %v152, %v189
    %191 = vrot.lane.b32.xlu0 %v43, 32
    %v192 = vpop.permute.xlu0 %191
    %v194 = vsel %vm44, %v192, 0.0
    %195 = vadd.xlane.f32.xlu0 %v194
    %v196 = vpop.xlane.xlu0 %195
    %v197 = vmul.f32 %v196, %v54
    %v198 = vsub.f32 %v43, %v197
    %v199 = vmul.f32 %v198, %v198
    %201 = vrot.lane.b32.xlu0 %v199, 32
    %v202 = vpop.permute.xlu0 %201
    %v204 = vsel %vm44, %v202, 0.0
    %205 = vadd.xlane.f32.xlu0 %v204
    %v206 = vpop.xlane.xlu0 %205
    %v207 = vmul.f32 %v206, %v67
    %v208 = vrsqrt.pop %v207
    %v209 = vmul.f32 %v208, %v207
    %v210 = vmul.f32 %v209, %v208
    %v211 = vmul.f32 0.5, %v210
    %v212 = vsub.f32 1.5, %v211
    %v213 = vmul.f32 %v208, %v212
    %v214 = vmul.f32 %v207, %v213
    %vm215 = vcmp.eq.f32.partialorder %v207, inf
    %v216 = vsel %vm215, %v207, %v214
    %vm217 = vcmp.eq.f32.partialorder %v207, 0.0
    %v218 = vand.u32 %v207, 2147483648
    %v219 = vsel %vm217, %v218, %v216
    %v220 = vadd.f32 %v219, 1e-06
    %v221 = vrcp.pop %v220
    %v222 = vmul.f32 %v220, %v221
    %v223 = vsub.f32 1.0, %v222
    %v224 = vmul.f32 %v221, %v223
    %v225 = vadd.f32 %v221, %v224
    %vm226 = vweird.f32 %v220
    %vm227 = vweird.f32 %v221
    %vm228 = vmor %vm226, %vm227
    %v229 = vsel %vm228, %v221, %v225
    %v230 = vand.u32 2147483647, %v220
    %vm231 = vcmp.eq.f32.partialorder %v230, 8.507059e+37
    %v232 = vand.u32 %v220, 2147483648
    %v233 = vor.u32 1.1754944e-38, %v232
    %v234 = vsel %vm231, %v233, %v229
    %v235 = vmul.f32 1.0, %v234
    %v236 = vmul.f32 %v198, %v235
    %vm237 = vcmask 261120
    %v238 = vsel %vm237, %v97, %v144
    %vm239 = vcmask 523264
    %v240 = vsel %vm239, %v238, %v190
    %vm241 = vcmask 785408
    %v242 = vsel %vm241, %v240, %v236
    %v243 = vld [vmem:[#allocation5] sm:$0x1]
    %v245 = vperm.slane %v243, 0
    %v247 = vmul.f32 %v242, %v245
    %v248 = vld [vmem:[%s2] sm:$0x1]
    %v250 = vperm.slane %v248, 0
    %v252 = vadd.f32 %v247, %v250
    %253 = vst [vmem:[#allocation7] sm:$0xf] %v252
    // Predicated region
    $region22: #{tpu_custom_call.1} parent=1 // pred_check
      _
    $region23: #{tpu_custom_call.1} parent=1 // pred_check_branch
      %255 = sbr.rel (0) target = $region25
    $region24: #{tpu_custom_call.1} parent=1 // pred_region
      %257 = vsyncadd [#allocation4], 0
      %s259 = sshll.u32 [#allocation7], 4
      %s260 = int_to_ptr.vmem [resolvable:$true] %s259
      %s261 = sshll.u32 %s3, 4
      %s262 = int_to_ptr.hbm [resolvable:$true] %s261
      %264 = dma.vmem_to_hbm [thread:$0]  %s260, 64, %s262, [#allocation4]
    $region25: #{tpu_custom_call.1} parent=1 // pred_fallthru
      _
    // Predicated region
    $region26: #{tpu_custom_call.1} parent=1 // pred_check
      _
    $region27: #{tpu_custom_call.1} parent=1 // pred_check_branch
      %266 = sbr.rel (0) target = $region29
    $region28: #{tpu_custom_call.1} parent=1 // pred_region
      %268 = dma.done [#allocation4], 64
    $region29: #{tpu_custom_call.1} parent=1 // pred_fallthru
      _
    %269 = vsyncpa [#allocation3], 1
    %270 = vsyncpa [#allocation6], 1
    %271 = vsyncpa [#allocation4], 1

</llo_original>
